<compile_context>
chip_gen: v6e
topology: v6e:2x2x1
jax: 0.10.0
libtpu: 0.0.40
codegen_flags: <defaults>
</compile_context>

<pallas_src>
import jax
import jax.numpy as jnp
from jax.experimental import pallas as pl
from jax.experimental.pallas import tpu as pltpu

_EPS = 1e-6
_LANE = 128
_MAX_TILE_ELEMS = 256 * 1024  # per-channel elems per block -> 3 MiB f32 block


def _cdiv(a: int, b: int) -> int:
    return -(-a // b)


def _round_up(x: int, m: int) -> int:
    return _cdiv(x, m) * m


def _channel_sum_kernel(img_ref, sum_ref):
    # img_ref : (1, 3, T) spatial tile of one batch element
    # sum_ref : (1, 3, 128) f32 accumulator; same block for every tile index
    @pl.when(pl.program_id(1) == 0)
    def _():
        sum_ref[...] = jnp.zeros_like(sum_ref)

    blk = img_ref[...].astype(jnp.float32)            # f32 accumulation
    part = jnp.sum(blk, axis=-1, keepdims=True)       # (1, 3, 1), XLU reduce
    sum_ref[...] = sum_ref[...] + part                # broadcast over lanes


def _apply_kernel(coef_ref, img_ref, out_ref):
    # coef_ref: (1, 3, 1) f32 per-channel gains; img/out: (1, 3, T)
    scaled = coef_ref[...] * img_ref[...].astype(jnp.float32)
    out_ref[...] = jnp.clip(scaled, 0.0, 1.0).astype(out_ref.dtype)


def temperature_filter(image: jax.Array, x: jax.Array) -> jax.Array:
    """image: (N, 3, H, W); x: per-sample scalar, shape (N,), (N,1,1,1) or ()."""
    N, C, H, W = image.shape
    assert C == 3, "TemperatureFilter expects 3-channel RGB input"
    HW = H * W

    # Lane-dense flattened layout + spatial tiling with minimal padding.
    hw128 = _round_up(HW, _LANE)
    num_tiles = max(1, _cdiv(hw128, _MAX_TILE_ELEMS))
    tile = _round_up(_cdiv(hw128, num_tiles), _LANE)
    hw_pad = tile * num_tiles

    img_flat = image.reshape(N, C, HW)
    if hw_pad != HW:
        img_flat = jnp.pad(img_flat, ((0, 0), (0, 0), (0, hw_pad - HW)))

    # ---- Pass 1: tiled per-channel spatial sums (f32 accumulate) ------------
    sums = pl.pallas_call(
        _channel_sum_kernel,
        out_shape=jax.ShapeDtypeStruct((N, 3, _LANE), jnp.float32),
        grid=(N, num_tiles),
        in_specs=[pl.BlockSpec((1, 3, tile), lambda b, t: (b, 0, t))],
        out_specs=pl.BlockSpec((1, 3, _LANE), lambda b, t: (b, 0, 0)),
        compiler_params=pltpu.CompilerParams(
            dimension_semantics=("parallel", "arbitrary")),
    )(img_flat)

    # ---- Tiny per-sample coefficient math (shape (N, 3)) in plain JAX -------
    mean = sums[:, :, 0] / float(HW)                  # zero padding is inert
    meanR, meanG, meanB = mean[:, 0], mean[:, 1], mean[:, 2]

    gray = (meanR + meanG + meanB) / 3.0
    coefR = gray / (meanR + _EPS)
    coefG = gray / (meanG + _EPS)
    coefB = gray / (meanB + _EPS)

    xv = jnp.ravel(x).astype(jnp.float32)
    if xv.shape[0] == 1:
        xv = jnp.broadcast_to(xv, (N,))
    is_pos = (xv > 0).astype(jnp.float32)
    is_neg = (xv < 0).astype(jnp.float32)
    is_zero = (xv == 0).astype(jnp.float32)
    absx = xv * jnp.sign(xv)

    meanR_ = meanR + absx * is_neg
    meanG_ = meanG + absx * 0.5 * (1.0 - is_zero)
    meanB_ = meanB + absx * is_pos
    gray_ = (meanR_ + meanG_ + meanB_) / 3.0
    coefR_ = gray_ / (meanR_ + _EPS) + (1.0 - coefR)
    coefG_ = gray_ / (meanG_ + _EPS) + (1.0 - coefG)
    coefB_ = gray_ / (meanB_ + _EPS) + (1.0 - coefB)

    coef = jnp.stack([coefR_, coefG_, coefB_], axis=1)[:, :, None]  # (N, 3, 1)

    # ---- Pass 2: lane-dense, double-buffered elementwise apply --------------
    out_flat = pl.pallas_call(
        _apply_kernel,
        out_shape=jax.ShapeDtypeStruct((N, 3, hw_pad), image.dtype),
        grid=(N, num_tiles),
        in_specs=[
            pl.BlockSpec((1, 3, 1), lambda b, t: (b, 0, 0)),     # per-sample coefs
            pl.BlockSpec((1, 3, tile), lambda b, t: (b, 0, t)),  # image tile
        ],
        out_specs=pl.BlockSpec((1, 3, tile), lambda b, t: (b, 0, t)),
        compiler_params=pltpu.CompilerParams(
            dimension_semantics=("parallel", "parallel")),
    )(coef, img_flat)

    return out_flat[:, :, :HW].reshape(N, C, H, W)


def _reference(image, x):
    # Pure-JAX reference mirroring the PyTorch forward exactly.
    eps = _EPS
    R, G, B = image[:, 0:1], image[:, 1:2], image[:, 2:3]
    meanR = jnp.mean(R, axis=(2, 3), keepdims=True)
    meanG = jnp.mean(G, axis=(2, 3), keepdims=True)
    meanB = jnp.mean(B, axis=(2, 3), keepdims=True)
    gray = (meanR + meanG + meanB) / 3
    coefR, coefG, coefB = gray / (meanR + eps), gray / (meanG + eps), gray / (meanB + eps)
    aR, aG, aB = 1 - coefR, 1 - coefG, 1 - coefB
    is_pos = (x > 0).astype(jnp.float32)
    is_neg = (x < 0).astype(jnp.float32)
    is_zero = (x == 0).astype(jnp.float32)
    meanR_ = meanR + x * jnp.sign(x) * is_neg
    meanG_ = meanG + x * jnp.sign(x) * 0.5 * (1 - is_zero)
    meanB_ = meanB + x * jnp.sign(x) * is_pos
    gray_ = (meanR_ + meanG_ + meanB_) / 3
    coefR_ = gray_ / (meanR_ + eps) + aR
    coefG_ = gray_ / (meanG_ + eps) + aG
    coefB_ = gray_ / (meanB_ + eps) + aB
    out = jnp.concatenate((coefR_ * R, coefG_ * G, coefB_ * B), axis=1)
    return jnp.clip(out, 0.0, 1.0)


if __name__ == "__main__":
    key = jax.random.PRNGKey(0)
    k_img, k_x = jax.random.split(key)
    N, C, H, W = 2, 3, 16, 16
    image = jax.random.uniform(k_img, (N, C, H, W), dtype=jnp.float32)
    x = jax.random.uniform(k_x, (N, 1, 1, 1), dtype=jnp.float32,
                           minval=-0.2, maxval=0.2)

    out = jax.jit(temperature_filter)(image, x)
    out = jax.block_until_ready(out)

    ref = _reference(image, x)
    assert out.shape == (N, C, H, W)
    assert jnp.allclose(out, ref, atol=1e-5, rtol=1e-5), "mismatch vs reference"
    print("KERNEL_OK")
</pallas_src>

<mosaic_0001>
module attributes {stable_mosaic.version = 11 : i64} {
  func.func @_channel_sum_kernel(%arg0: i32, %arg1: i32, %arg2: memref<1x3x256xf32, #tpu.memory_space<vmem>>, %arg3: memref<1x3x128xf32, #tpu.memory_space<vmem>>) attributes {dimension_semantics = [#tpu.dimension_semantics<parallel>, #tpu.dimension_semantics<arbitrary>], iteration_bounds = array<i64: 2, 1>, scalar_prefetch = 0 : i64, scratch_operands = 0 : i64, tpu.core_type = #tpu.core_type<tc>, window_params = [{transform_indices = @transform_0, window_bounds = array<i64: 1, 3, 256>}, {transform_indices = @transform_1, window_bounds = array<i64: 1, 3, 128>}]} {
    %c0_i32 = arith.constant 0 : i32
    %0 = arith.cmpi eq, %arg1, %c0_i32 : i32
    %1 = arith.extui %0 : i1 to i32
    %c0_i32_0 = arith.constant 0 : i32
    %2 = arith.cmpi ne, %1, %c0_i32_0 : i32
    scf.if %2 {
      %cst_9 = arith.constant 0.000000e+00 : f32
      %10 = vector.broadcast %cst_9 : f32 to vector<1x3x128xf32>
      %c0_10 = arith.constant 0 : index
      %c0_11 = arith.constant 0 : index
      %c0_12 = arith.constant 0 : index
      %11 = vector.load %arg3[%c0_10, %c0_11, %c0_12] : memref<1x3x128xf32, #tpu.memory_space<vmem>>, vector<1x3x128xf32>
      tpu.vector_store %arg3[%c0_10, %c0_11, %c0_12], %10 {strides = array<i32>} : memref<1x3x128xf32, #tpu.memory_space<vmem>>, vector<1x3x128xf32>,
    } else {
    }
    %c0 = arith.constant 0 : index
    %c0_1 = arith.constant 0 : index
    %c0_2 = arith.constant 0 : index
    %3 = vector.load %arg2[%c0, %c0_1, %c0_2] : memref<1x3x256xf32, #tpu.memory_space<vmem>>, vector<1x3x256xf32>
    %cst = arith.constant dense<0.000000e+00> : vector<1x3xf32>
    %4 = vector.multi_reduction <add>, %3, %cst [2] : vector<1x3x256xf32> to vector<1x3xf32>
    %5 = vector.shape_cast %4 : vector<1x3xf32> to vector<1x3x1xf32>
    %c0_3 = arith.constant 0 : index
    %c0_4 = arith.constant 0 : index
    %c0_5 = arith.constant 0 : index
    %6 = vector.load %arg3[%c0_3, %c0_4, %c0_5] : memref<1x3x128xf32, #tpu.memory_space<vmem>>, vector<1x3x128xf32>
    %7 = vector.broadcast %5 : vector<1x3x1xf32> to vector<1x3x128xf32>
    %8 = arith.addf %6, %7 : vector<1x3x128xf32>
    %c0_6 = arith.constant 0 : index
    %c0_7 = arith.constant 0 : index
    %c0_8 = arith.constant 0 : index
    %9 = vector.load %arg3[%c0_6, %c0_7, %c0_8] : memref<1x3x128xf32, #tpu.memory_space<vmem>>, vector<1x3x128xf32>
    tpu.vector_store %arg3[%c0_6, %c0_7, %c0_8], %8 {strides = array<i32>} : memref<1x3x128xf32, #tpu.memory_space<vmem>>, vector<1x3x128xf32>,
    return
  }
  func.func @transform_0(%arg0: i32, %arg1: i32) -> (i32, i32, i32) {
    %c0_i32 = arith.constant 0 : i32
    %c0_i32_0 = arith.constant 0 : i32
    return %arg0, %c0_i32, %arg1 : i32, i32, i32
  }
  func.func @transform_1(%arg0: i32, %arg1: i32) -> (i32, i32, i32) {
    %c0_i32 = arith.constant 0 : i32
    %c0_i32_0 = arith.constant 0 : i32
    %c0_i32_1 = arith.constant 0 : i32
    return %arg0, %c0_i32, %c0_i32_0 : i32, i32, i32
  }
}

module attributes {stable_mosaic.version = 11 : i64} {
  func.func @_apply_kernel(%arg0: i32, %arg1: i32, %arg2: memref<1x3x1xf32, #tpu.memory_space<vmem>>, %arg3: memref<1x3x256xf32, #tpu.memory_space<vmem>>, %arg4: memref<1x3x256xf32, #tpu.memory_space<vmem>>) attributes {dimension_semantics = [#tpu.dimension_semantics<parallel>, #tpu.dimension_semantics<parallel>], iteration_bounds = array<i64: 2, 1>, scalar_prefetch = 0 : i64, scratch_operands = 0 : i64, tpu.core_type = #tpu.core_type<tc>, window_params = [{transform_indices = @transform_0, window_bounds = array<i64: 1, 3, 1>}, {transform_indices = @transform_1, window_bounds = array<i64: 1, 3, 256>}, {transform_indices = @transform_2, window_bounds = array<i64: 1, 3, 256>}]} {
    %c0 = arith.constant 0 : index
    %c0_0 = arith.constant 0 : index
    %c0_1 = arith.constant 0 : index
    %0 = vector.load %arg2[%c0, %c0_0, %c0_1] : memref<1x3x1xf32, #tpu.memory_space<vmem>>, vector<1x3x1xf32>
    %c0_2 = arith.constant 0 : index
    %c0_3 = arith.constant 0 : index
    %c0_4 = arith.constant 0 : index
    %1 = vector.load %arg3[%c0_2, %c0_3, %c0_4] : memref<1x3x256xf32, #tpu.memory_space<vmem>>, vector<1x3x256xf32>
    %2 = vector.broadcast %0 : vector<1x3x1xf32> to vector<1x3x256xf32>
    %3 = arith.mulf %2, %1 : vector<1x3x256xf32>
    %cst = arith.constant 0.000000e+00 : f32
    %cst_5 = arith.constant 1.000000e+00 : f32
    %4 = vector.broadcast %cst : f32 to vector<1x3x256xf32>
    %5 = arith.maximumf %4, %3 : vector<1x3x256xf32>
    %6 = vector.broadcast %cst_5 : f32 to vector<1x3x256xf32>
    %7 = arith.minimumf %6, %5 : vector<1x3x256xf32>
    %c0_6 = arith.constant 0 : index
    %c0_7 = arith.constant 0 : index
    %c0_8 = arith.constant 0 : index
    %8 = vector.load %arg4[%c0_6, %c0_7, %c0_8] : memref<1x3x256xf32, #tpu.memory_space<vmem>>, vector<1x3x256xf32>
    tpu.vector_store %arg4[%c0_6, %c0_7, %c0_8], %7 {strides = array<i32>} : memref<1x3x256xf32, #tpu.memory_space<vmem>>, vector<1x3x256xf32>,
    return
  }
  func.func @transform_0(%arg0: i32, %arg1: i32) -> (i32, i32, i32) {
    %c0_i32 = arith.constant 0 : i32
    %c0_i32_0 = arith.constant 0 : i32
    %c0_i32_1 = arith.constant 0 : i32
    return %arg0, %c0_i32, %c0_i32_0 : i32, i32, i32
  }
  func.func @transform_1(%arg0: i32, %arg1: i32) -> (i32, i32, i32) {
    %c0_i32 = arith.constant 0 : i32
    %c0_i32_0 = arith.constant 0 : i32
    return %arg0, %c0_i32, %arg1 : i32, i32, i32
  }
  func.func @transform_2(%arg0: i32, %arg1: i32) -> (i32, i32, i32) {
    %c0_i32 = arith.constant 0 : i32
    %c0_i32_0 = arith.constant 0 : i32
    return %arg0, %c0_i32, %arg1 : i32, i32, i32
  }
}

</mosaic_0001>

<llo_original>
// kernel: temperature_filter.3
$region0: #{temperature_filter.3}
  #allocation0 [shape = 'u32[]', space=smem, size = 0x4, offset = 0x4, fixed_abs, tag = 'smem constant byte address 0x4 - core index']
  #allocation1 [shape = 'u32[144,128]{1,0:T(1,128)}', space=vmem, size = 0x12000, scoped, tag = 'internal scratch']
  %s0 = inlined_call_operand.vmem [shape: f32[2,3,1], index: 0, kind: input, shape index: {}]
  %s1 = inlined_call_operand.vmem [shape: f32[2,3,256], index: 1, kind: input, shape index: {}]
  %s2 = inlined_call_operand.vmem [shape: f32[2,3,256], index: 2, kind: output, shape index: {}]
  %s3 = sld [smem:[#allocation0]]
  $region41: #{temperature_filter.3} parent=0
    _
  %s5 = ssub.s32 1, %s3
  %s6 = scalar_select 0, %s5, %s3
  loop: start=0, step=1, limit=4
  $region2: #{temperature_filter.3} parent=0 // loop_pre_header
    _
  $region3: #{temperature_filter.3} parent=0 // loop_header
    %s8 = sphi 0, %s12
    %p9 = scmp.ge.s32.totalorder %s8, 4
    %s15 = sphi 0, %s27
    %s16 = sphi 0, %s23
    %s17 = sphi 0, %s15
    %s18 = sphi 0, %s16
    %s19 = sphi 0, %s17
    %s20 = sphi 0, %s18
    %s30 = sphi 0, %s32
    %s33 = sphi 0, %s30
    %s34 = sphi 0, %s33
    %s50 = sphi 0, %s34
    %s58 = sphi 0, %s60
    %s61 = sphi 0, %s58
    %s62 = sphi 0, %s61
    %s78 = sphi 0, %s62
    %s86 = sphi 0, %s88
    %s89 = sphi 0, %s86
    %s90 = sphi 0, %s89
    %s106 = sphi 0, %s90
  $region4: #{temperature_filter.3} parent=0 // loop_header_branch
    %11 = sbr.rel (%p9) target = $region8
  $region5: #{temperature_filter.3} parent=0 // loop_body
    %s13 = ssub.s32 %s8, 1
    %s14 = ssub.s32 %s8, 2
    %s21 = sadd.s32 1, %s16
    %p22 = scmp.ge.s32.totalorder %s21, 1
    %s23 = scalar_select %p22, 0, %s21
    %s24 = sadd.s32 1, %s15
    %s25 = scalar_select %p22, %s24, %s15
    %p26 = scmp.ge.s32.totalorder %s25, 2
    %s27 = scalar_select %p26, 0, %s25
    %s28 = ssub.s32 %s15, %s27
    %p29 = scmp.eq.s32.totalorder %s28, 0
    %s31 = sadd.s32 %s30, 1
    %s32 = scalar_select %p29, %s30, %s31
    %p35 = pneg %p29
    %p36 = scmp.eq.s32.totalorder %s8, 1
    %p37 = por %p35, %p36
    %p38 = scmp.ne.s32.totalorder %s30, %s33
    %p39 = scmp.eq.s32.totalorder %s8, 0
    %p40 = por %p38, %p39
    %p41 = scmp.ne.s32.totalorder %s30, %s33
    %p42 = scmp.eq.s32.totalorder %s13, 1
    %p43 = por %p41, %p42
    %p44 = scmp.ne.s32.totalorder %s33, %s34
    %p45 = scmp.eq.s32.totalorder %s13, 0
    %p46 = por %p44, %p45
    %p47 = scmp.ne.s32.totalorder %s33, %s34
    %p48 = scmp.eq.s32.totalorder %s14, 1
    %p49 = por %p47, %p48
    %p51 = scmp.ne.s32.totalorder %s34, %s50
    %p52 = scmp.eq.s32.totalorder %s14, 0
    %p53 = por %p51, %p52
    %s54 = ssub.s32 %s15, %s27
    %s55 = ssub.s32 %s16, %s23
    %s56 = sor.u32 %s54, %s55
    %p57 = scmp.eq.s32.totalorder %s56, 0
    %s59 = sadd.s32 %s58, 1
    %s60 = scalar_select %p57, %s58, %s59
    %p63 = pneg %p57
    %p64 = scmp.eq.s32.totalorder %s8, 1
    %p65 = por %p63, %p64
    %p66 = scmp.ne.s32.totalorder %s58, %s61
    %p67 = scmp.eq.s32.totalorder %s8, 0
    %p68 = por %p66, %p67
    %p69 = scmp.ne.s32.totalorder %s58, %s61
    %p70 = scmp.eq.s32.totalorder %s13, 1
    %p71 = por %p69, %p70
    %p72 = scmp.ne.s32.totalorder %s61, %s62
    %p73 = scmp.eq.s32.totalorder %s13, 0
    %p74 = por %p72, %p73
    %p75 = scmp.ne.s32.totalorder %s61, %s62
    %p76 = scmp.eq.s32.totalorder %s14, 1
    %p77 = por %p75, %p76
    %p79 = scmp.ne.s32.totalorder %s62, %s78
    %p80 = scmp.eq.s32.totalorder %s14, 0
    %p81 = por %p79, %p80
    %s82 = ssub.s32 %s15, %s27
    %s83 = ssub.s32 %s16, %s23
    %s84 = sor.u32 %s82, %s83
    %p85 = scmp.eq.s32.totalorder %s84, 0
    %s87 = sadd.s32 %s86, 1
    %s88 = scalar_select %p85, %s86, %s87
    %p91 = pneg %p85
    %p92 = scmp.eq.s32.totalorder %s8, 1
    %p93 = por %p91, %p92
    %p94 = scmp.ne.s32.totalorder %s86, %s89
    %p95 = scmp.eq.s32.totalorder %s8, 0
    %p96 = por %p94, %p95
    %p97 = scmp.ne.s32.totalorder %s86, %s89
    %p98 = scmp.eq.s32.totalorder %s13, 1
    %p99 = por %p97, %p98
    %p100 = scmp.ne.s32.totalorder %s89, %s90
    %p101 = scmp.eq.s32.totalorder %s13, 0
    %p102 = por %p100, %p101
    %p103 = scmp.ne.s32.totalorder %s89, %s90
    %p104 = scmp.eq.s32.totalorder %s14, 1
    %p105 = por %p103, %p104
    %p107 = scmp.ne.s32.totalorder %s90, %s106
    %p108 = scmp.eq.s32.totalorder %s14, 0
    %p109 = por %p107, %p108
    %p110 = scmp.le.s32.totalorder 1, %s8
    %p111 = scmp.lt.s32.totalorder %s8, 3
    %p112 = pnand %p110, %p111
    %p113 = pneg %p112
    // Predicated region
    $region9: #{temperature_filter.3} parent=5 // pred_check
      _
    $region10: #{temperature_filter.3} parent=5 // pred_check_branch
      %115 = sbr.rel (%p112) target = $region12
    $region11: #{temperature_filter.3} parent=5 // pred_region
      %s116 = ssub.s32 %s8, 1
    $region12: #{temperature_filter.3} parent=5 // pred_fallthru
      _
    %p117 = scmp.lt.s32.totalorder %s8, 2
    // Predicated region
    $region13: #{temperature_filter.3} parent=5 // pred_check
      %p118 = pneg %p117
    $region14: #{temperature_filter.3} parent=5 // pred_check_branch
      %120 = sbr.rel (%p118) target = $region16
    $region15: #{temperature_filter.3} parent=5 // pred_region
      // Predicated region
      $region17: #{temperature_filter.3} parent=15 // pred_check
        %p121 = pneg %p40
      $region18: #{temperature_filter.3} parent=15 // pred_check_branch
        %123 = sbr.rel (%p121) target = $region20
      $region19: #{temperature_filter.3} parent=15 // pred_region
        %p124 = scmp.lt.s32.totalorder %s15, 1
        %s125 = scalar_select %p124, %s15, 1
        %s126 = smul.addr %s125, 4
        %s127 = scalar_lea.vmem %s0, %s126
      $region20: #{temperature_filter.3} parent=15 // pred_fallthru
        _
      // Predicated region
      $region21: #{temperature_filter.3} parent=15 // pred_check
        %p128 = pneg %p68
      $region22: #{temperature_filter.3} parent=15 // pred_check_branch
        %130 = sbr.rel (%p128) target = $region24
      $region23: #{temperature_filter.3} parent=15 // pred_region
        %s131 = smul.u32 2, %s16
        %p132 = scmp.lt.s32.totalorder %s15, 1
        %s133 = scalar_select %p132, %s15, 1
        %p134 = scmp.lt.s32.totalorder %s131, 1
        %s135 = scalar_select %p134, %s131, 1
        %s136 = smul.addr %s133, 2
        %s137 = sadd.s32 %s135, %s136
        %s138 = smul.addr %s137, 4
        %s139 = scalar_lea.vmem %s1, %s138
        %s140 = smul.u32 2, %s16
      $region24: #{temperature_filter.3} parent=15 // pred_fallthru
        _
    $region16: #{temperature_filter.3} parent=5 // pred_fallthru
      _
    %p141 = scmp.le.s32.totalorder 1, %s8
    %p142 = scmp.lt.s32.totalorder %s8, 3
    %p143 = pnand %p141, %p142
    %p144 = pneg %p143
    // Predicated region
    $region25: #{temperature_filter.3} parent=5 // pred_check
      _
    $region26: #{temperature_filter.3} parent=5 // pred_check_branch
      %146 = sbr.rel (%p143) target = $region28
    $region27: #{temperature_filter.3} parent=5 // pred_region
      %s147 = ssub.s32 %s8, 1
      %p148 = scmp.lt.s32.totalorder %s17, 1
      %s149 = scalar_select %p148, %s17, 1
      %s150 = smul.addr %s149, 4
      %s151 = scalar_lea.vmem %s0, %s150
      %p152 = pneg %p46
      %p153 = pneg %p43
      %s154 = smul.u32 2, %s18
      %p155 = scmp.lt.s32.totalorder %s17, 1
      %s156 = scalar_select %p155, %s17, 1
      %p157 = scmp.lt.s32.totalorder %s154, 1
      %s158 = scalar_select %p157, %s154, 1
      %s159 = smul.addr %s156, 2
      %s160 = sadd.s32 %s158, %s159
      %s161 = smul.addr %s160, 4
      %s162 = scalar_lea.vmem %s1, %s161
      %p163 = pneg %p74
      %p164 = pneg %p71
      %p165 = pneg %p102
      %p166 = pneg %p99
      %s167 = smul.u32 2, %s18
      %p168 = scmp.lt.s32.totalorder %s17, 1
      %s169 = scalar_select %p168, %s17, 1
      %p170 = scmp.lt.s32.totalorder %s167, 1
      %s171 = scalar_select %p170, %s167, 1
      %s172 = smul.addr %s169, 2
      %s173 = sadd.s32 %s171, %s172
      %s174 = smul.addr %s173, 4
      %s175 = scalar_lea.vmem %s2, %s174
      %p176 = scmp.lt.s32.totalorder %s17, 1
      %s177 = scalar_select %p176, %s17, 1
      %s178 = smul.addr %s177, 4
      %s179 = scalar_lea.vmem %s0, %s178
      %s180 = smul.u32 2, %s18
      %p181 = scmp.lt.s32.totalorder %s17, 1
      %s182 = scalar_select %p181, %s17, 1
      %p183 = scmp.lt.s32.totalorder %s180, 1
      %s184 = scalar_select %p183, %s180, 1
      %s185 = smul.addr %s182, 2
      %s186 = sadd.s32 %s184, %s185
      %s187 = smul.addr %s186, 4
      %s188 = scalar_lea.vmem %s1, %s187
      %s189 = smul.u32 2, %s18
      %s190 = smul.u32 2, %s18
      %p191 = scmp.lt.s32.totalorder %s17, 1
      %s192 = scalar_select %p191, %s17, 1
      %p193 = scmp.lt.s32.totalorder %s190, 1
      %s194 = scalar_select %p193, %s190, 1
      %s195 = smul.addr %s192, 2
      %s196 = sadd.s32 %s194, %s195
      %s197 = smul.addr %s196, 4
      %s198 = scalar_lea.vmem %s2, %s197
      %s199 = smul.u32 2, %s18
      %v200 = vld [vmem:[%s179] sm:$0x7]
      %v201 = vld [vmem:[%s188] sm:$0x77]
      %203 = vset.pattern.permute.xlu0 0
      %204 = vperm.xlu0 %203, %v200
      %v205 = vpop.permute.xlu0 %204
      %v208 = vcombine.high %v201, %v201
      %v210 = vmul.f32 %v205, %v201
      %v211 = vmul.f32 %v205, %v208
      %v212 = vmax.f32 %v210, 0.0
      %v213 = vmax.f32 %v211, 0.0
      %v214 = vmin.f32 %v212, 1.0
      %v215 = vmin.f32 %v213, 1.0
      %v218 = vcombine.low %v214, %v215
      %220 = vst [vmem:[%s198] sm:$0x77] %v218
      %s221 = smul.u32 2, %s18
      %p222 = scmp.lt.s32.totalorder %s17, 1
      %s223 = scalar_select %p222, %s17, 1
      %p224 = scmp.lt.s32.totalorder %s221, 1
      %s225 = scalar_select %p224, %s221, 1
      %s226 = smul.addr %s223, 2
      %s227 = sadd.s32 %s225, %s226
      %s228 = smul.addr %s227, 4
      %s229 = scalar_lea.vmem %s2, %s228
      // Predicated region
      $region29: #{temperature_filter.3} parent=27 // pred_check
        %p230 = pneg %p99
      $region30: #{temperature_filter.3} parent=27 // pred_check_branch
        %232 = sbr.rel (%p230) target = $region32
      $region31: #{temperature_filter.3} parent=27 // pred_region
        %s233 = smul.u32 2, %s18
      $region32: #{temperature_filter.3} parent=27 // pred_fallthru
        _
    $region28: #{temperature_filter.3} parent=5 // pred_fallthru
      _
    %p234 = scmp.le.s32.totalorder 2, %s8
    // Predicated region
    $region33: #{temperature_filter.3} parent=5 // pred_check
      %p235 = pneg %p234
    $region34: #{temperature_filter.3} parent=5 // pred_check_branch
      %237 = sbr.rel (%p235) target = $region36
    $region35: #{temperature_filter.3} parent=5 // pred_region
      %s238 = ssub.s32 %s8, 2
      // Predicated region
      $region37: #{temperature_filter.3} parent=35 // pred_check
        %p239 = pneg %p105
      $region38: #{temperature_filter.3} parent=35 // pred_check_branch
        %241 = sbr.rel (%p239) target = $region40
      $region39: #{temperature_filter.3} parent=35 // pred_region
        %s242 = smul.u32 2, %s20
        %p243 = scmp.lt.s32.totalorder %s19, 1
        %s244 = scalar_select %p243, %s19, 1
        %p245 = scmp.lt.s32.totalorder %s242, 1
        %s246 = scalar_select %p245, %s242, 1
        %s247 = smul.addr %s244, 2
        %s248 = sadd.s32 %s246, %s247
        %s249 = smul.addr %s248, 4
        %s250 = scalar_lea.vmem %s2, %s249
      $region40: #{temperature_filter.3} parent=35 // pred_fallthru
        _
    $region36: #{temperature_filter.3} parent=5 // pred_fallthru
      _
  $region6: #{temperature_filter.3} parent=0 // loop_footer
    %s12 = sadd.s32 1, %s8
  $region7: #{temperature_filter.3} parent=0 // loop_footer_branch
    %7 = sbr.rel target = $region3
  $region8: #{temperature_filter.3} parent=0 // loop_exit
    _

// kernel: temperature_filter.2
$region0: #{temperature_filter.2}
  #allocation0 [shape = 'u32[]', space=smem, size = 0x4, offset = 0x4, fixed_abs, tag = 'smem constant byte address 0x4 - core index']
  #allocation1 [shape = 'u32[144,128]{1,0:T(1,128)}', space=vmem, size = 0x12000, scoped, tag = 'internal scratch']
  %s0 = inlined_call_operand.vmem [shape: f32[2,3,256], index: 0, kind: input, shape index: {}]
  %s1 = inlined_call_operand.vmem [shape: f32[2,3,128], index: 1, kind: output, shape index: {}]
  %s2 = sld [smem:[#allocation0]]
  $region41: #{temperature_filter.2} parent=0
    _
  %s4 = ssub.s32 1, %s2
  %s5 = scalar_select 0, %s4, %s2
  loop: start=0, step=1, limit=4
  $region2: #{temperature_filter.2} parent=0 // loop_pre_header
    _
  $region3: #{temperature_filter.2} parent=0 // loop_header
    %s7 = sphi 0, %s11
    %p8 = scmp.ge.s32.totalorder %s7, 4
    %s14 = sphi 0, %s26
    %s15 = sphi 0, %s22
    %s16 = sphi 0, %s14
    %s17 = sphi 0, %s15
    %s18 = sphi 0, %s16
    %s19 = sphi 0, %s17
    %s31 = sphi 0, %s33
    %s34 = sphi 0, %s31
    %s35 = sphi 0, %s34
    %s51 = sphi 0, %s35
    %s57 = sphi 0, %s59
    %s60 = sphi 0, %s57
    %s61 = sphi 0, %s60
    %s77 = sphi 0, %s61
  $region4: #{temperature_filter.2} parent=0 // loop_header_branch
    %10 = sbr.rel (%p8) target = $region8
  $region5: #{temperature_filter.2} parent=0 // loop_body
    %s12 = ssub.s32 %s7, 1
    %s13 = ssub.s32 %s7, 2
    %s20 = sadd.s32 1, %s15
    %p21 = scmp.ge.s32.totalorder %s20, 1
    %s22 = scalar_select %p21, 0, %s20
    %s23 = sadd.s32 1, %s14
    %s24 = scalar_select %p21, %s23, %s14
    %p25 = scmp.ge.s32.totalorder %s24, 2
    %s26 = scalar_select %p25, 0, %s24
    %s27 = ssub.s32 %s14, %s26
    %s28 = ssub.s32 %s15, %s22
    %s29 = sor.u32 %s27, %s28
    %p30 = scmp.eq.s32.totalorder %s29, 0
    %s32 = sadd.s32 %s31, 1
    %s33 = scalar_select %p30, %s31, %s32
    %p36 = pneg %p30
    %p37 = scmp.eq.s32.totalorder %s7, 1
    %p38 = por %p36, %p37
    %p39 = scmp.ne.s32.totalorder %s31, %s34
    %p40 = scmp.eq.s32.totalorder %s7, 0
    %p41 = por %p39, %p40
    %p42 = scmp.ne.s32.totalorder %s31, %s34
    %p43 = scmp.eq.s32.totalorder %s12, 1
    %p44 = por %p42, %p43
    %p45 = scmp.ne.s32.totalorder %s34, %s35
    %p46 = scmp.eq.s32.totalorder %s12, 0
    %p47 = por %p45, %p46
    %p48 = scmp.ne.s32.totalorder %s34, %s35
    %p49 = scmp.eq.s32.totalorder %s13, 1
    %p50 = por %p48, %p49
    %p52 = scmp.ne.s32.totalorder %s35, %s51
    %p53 = scmp.eq.s32.totalorder %s13, 0
    %p54 = por %p52, %p53
    %s55 = ssub.s32 %s14, %s26
    %p56 = scmp.eq.s32.totalorder %s55, 0
    %s58 = sadd.s32 %s57, 1
    %s59 = scalar_select %p56, %s57, %s58
    %p62 = pneg %p56
    %p63 = scmp.eq.s32.totalorder %s7, 1
    %p64 = por %p62, %p63
    %p65 = scmp.ne.s32.totalorder %s57, %s60
    %p66 = scmp.eq.s32.totalorder %s7, 0
    %p67 = por %p65, %p66
    %p68 = scmp.ne.s32.totalorder %s57, %s60
    %p69 = scmp.eq.s32.totalorder %s12, 1
    %p70 = por %p68, %p69
    %p71 = scmp.ne.s32.totalorder %s60, %s61
    %p72 = scmp.eq.s32.totalorder %s12, 0
    %p73 = por %p71, %p72
    %p74 = scmp.ne.s32.totalorder %s60, %s61
    %p75 = scmp.eq.s32.totalorder %s13, 1
    %p76 = por %p74, %p75
    %p78 = scmp.ne.s32.totalorder %s61, %s77
    %p79 = scmp.eq.s32.totalorder %s13, 0
    %p80 = por %p78, %p79
    %p81 = scmp.le.s32.totalorder 1, %s7
    %p82 = scmp.lt.s32.totalorder %s7, 3
    %p83 = pnand %p81, %p82
    %p84 = pneg %p83
    // Predicated region
    $region9: #{temperature_filter.2} parent=5 // pred_check
      _
    $region10: #{temperature_filter.2} parent=5 // pred_check_branch
      %86 = sbr.rel (%p83) target = $region12
    $region11: #{temperature_filter.2} parent=5 // pred_region
      %s87 = ssub.s32 %s7, 1
    $region12: #{temperature_filter.2} parent=5 // pred_fallthru
      _
    %p88 = scmp.lt.s32.totalorder %s7, 2
    // Predicated region
    $region13: #{temperature_filter.2} parent=5 // pred_check
      %p89 = pneg %p88
    $region14: #{temperature_filter.2} parent=5 // pred_check_branch
      %91 = sbr.rel (%p89) target = $region16
    $region15: #{temperature_filter.2} parent=5 // pred_region
      // Predicated region
      $region17: #{temperature_filter.2} parent=15 // pred_check
        %p92 = pneg %p41
      $region18: #{temperature_filter.2} parent=15 // pred_check_branch
        %94 = sbr.rel (%p92) target = $region20
      $region19: #{temperature_filter.2} parent=15 // pred_region
        %s95 = smul.u32 2, %s15
        %p96 = scmp.lt.s32.totalorder %s14, 1
        %s97 = scalar_select %p96, %s14, 1
        %p98 = scmp.lt.s32.totalorder %s95, 1
        %s99 = scalar_select %p98, %s95, 1
        %s100 = smul.addr %s97, 2
        %s101 = sadd.s32 %s99, %s100
        %s102 = smul.addr %s101, 4
        %s103 = scalar_lea.vmem %s0, %s102
        %s104 = smul.u32 2, %s15
      $region20: #{temperature_filter.2} parent=15 // pred_fallthru
        _
    $region16: #{temperature_filter.2} parent=5 // pred_fallthru
      _
    %p105 = scmp.le.s32.totalorder 1, %s7
    %p106 = scmp.lt.s32.totalorder %s7, 3
    %p107 = pnand %p105, %p106
    %p108 = pneg %p107
    // Predicated region
    $region21: #{temperature_filter.2} parent=5 // pred_check
      _
    $region22: #{temperature_filter.2} parent=5 // pred_check_branch
      %110 = sbr.rel (%p107) target = $region24
    $region23: #{temperature_filter.2} parent=5 // pred_region
      %s111 = ssub.s32 %s7, 1
      %s112 = smul.u32 2, %s17
      %p113 = scmp.lt.s32.totalorder %s16, 1
      %s114 = scalar_select %p113, %s16, 1
      %p115 = scmp.lt.s32.totalorder %s112, 1
      %s116 = scalar_select %p115, %s112, 1
      %s117 = smul.addr %s114, 2
      %s118 = sadd.s32 %s116, %s117
      %s119 = smul.addr %s118, 4
      %s120 = scalar_lea.vmem %s0, %s119
      %p121 = pneg %p47
      %p122 = pneg %p44
      %p123 = pneg %p73
      %p124 = pneg %p70
      %p125 = scmp.lt.s32.totalorder %s16, 1
      %s126 = scalar_select %p125, %s16, 1
      %s127 = smul.addr %s126, 4
      %s128 = scalar_lea.vmem %s1, %s127
      %s129 = smul.u32 2, %s17
      %p130 = scmp.lt.s32.totalorder %s16, 1
      %s131 = scalar_select %p130, %s16, 1
      %p132 = scmp.lt.s32.totalorder %s129, 1
      %s133 = scalar_select %p132, %s129, 1
      %s134 = smul.addr %s131, 2
      %s135 = sadd.s32 %s133, %s134
      %s136 = smul.addr %s135, 4
      %s137 = scalar_lea.vmem %s0, %s136
      %s138 = smul.u32 2, %s17
      %p139 = scmp.lt.s32.totalorder %s16, 1
      %s140 = scalar_select %p139, %s16, 1
      %s141 = smul.addr %s140, 4
      %s142 = scalar_lea.vmem %s1, %s141
      %p143 = scmp.eq.s32.totalorder %s17, 0
      // Predicated region
      $region25: #{temperature_filter.2} parent=23 // pred_check
        %p144 = pneg %p143
      $region26: #{temperature_filter.2} parent=23 // pred_check_branch
        %146 = sbr.rel (%p144) target = $region28
      $region27: #{temperature_filter.2} parent=23 // pred_region
        %147 = vst [vmem:[%s142] sm:$0x7] 0.0
      $region28: #{temperature_filter.2} parent=23 // pred_fallthru
        _
      %v148 = vld [vmem:[%s137] sm:$0x77]
      %v150 = vcombine.high %v148, %v148
      %vm152 = vcmask 1042432
      %v153 = vsel %vm152, %v148, 0.0
      %v154 = vsel %vm152, %v150, 0.0
      %v155 = vadd.f32 %v153, %v154
      %156 = vadd.xlane.f32.xlu0 %v155
      %v157 = vpop.xlane.xlu0 %156
      %v158 = vld [vmem:[%s142] sm:$0x7]
      %v159 = vadd.f32 %v158, %v157
      %160 = vst [vmem:[%s142] sm:$0x7] %v159
      %p161 = scmp.lt.s32.totalorder %s16, 1
      %s162 = scalar_select %p161, %s16, 1
      %s163 = smul.addr %s162, 4
      %s164 = scalar_lea.vmem %s1, %s163
      // Predicated region
      $region29: #{temperature_filter.2} parent=23 // pred_check
        %p165 = pneg %p70
      $region30: #{temperature_filter.2} parent=23 // pred_check_branch
        %167 = sbr.rel (%p165) target = $region32
      $region31: #{temperature_filter.2} parent=23 // pred_region
        _
      $region32: #{temperature_filter.2} parent=23 // pred_fallthru
        _
    $region24: #{temperature_filter.2} parent=5 // pred_fallthru
      _
    %p168 = scmp.le.s32.totalorder 2, %s7
    // Predicated region
    $region33: #{temperature_filter.2} parent=5 // pred_check
      %p169 = pneg %p168
    $region34: #{temperature_filter.2} parent=5 // pred_check_branch
      %171 = sbr.rel (%p169) target = $region36
    $region35: #{temperature_filter.2} parent=5 // pred_region
      %s172 = ssub.s32 %s7, 2
      // Predicated region
      $region37: #{temperature_filter.2} parent=35 // pred_check
        %p173 = pneg %p76
      $region38: #{temperature_filter.2} parent=35 // pred_check_branch
        %175 = sbr.rel (%p173) target = $region40
      $region39: #{temperature_filter.2} parent=35 // pred_region
        %p176 = scmp.lt.s32.totalorder %s18, 1
        %s177 = scalar_select %p176, %s18, 1
        %s178 = smul.addr %s177, 4
        %s179 = scalar_lea.vmem %s1, %s178
      $region40: #{temperature_filter.2} parent=35 // pred_fallthru
        _
    $region36: #{temperature_filter.2} parent=5 // pred_fallthru
      _
  $region6: #{temperature_filter.2} parent=0 // loop_footer
    %s11 = sadd.s32 1, %s7
  $region7: #{temperature_filter.2} parent=0 // loop_footer_branch
    %6 = sbr.rel target = $region3
  $region8: #{temperature_filter.2} parent=0 // loop_exit
    _

</llo_original>
